<compile_context>
chip_gen: v5e
topology: v5e:2x2
jax: 0.10.0
libtpu: 0.0.40
codegen_flags: <defaults>
</compile_context>

<pallas_src>
import jax
import jax.numpy as jnp
from jax.experimental import pallas as pl
from jax.experimental.pallas import tpu as pltpu

# Small synthetic shapes consistent with the module's forward.
B, C_IN, H, W = 2, 4, 16, 16
KH = KW = 3
EMB = 32               # feature_extractor.embedding_dim (synthetic)
OUT = 128              # nn.Linear(embedding_dim, 128)
K = C_IN * KH * KW     # im2col patch length (36)
HW = H * W             # 256 spatial positions per image
NB = 2 * B             # both branches stacked -> 4 images per call
NBHW = NB * HW         # 1024 patch rows fed to one matmul

# Lane-dense padded sizes.
KP = 128               # padded contraction dim for the conv matmul
EP = 128               # padded embedding dim
OUT_ROWS = 8           # output slab rows: NB real rows + zero rows (sublane-aligned)


def _siamese_kernel(patches_ref, w_ref, b_ref, out_ref, pooled_ref):
    # Single grid step: the whole forward() for all NB images.
    x = patches_ref[...]                                   # (NBHW, KP) bf16
    wconv = w_ref[0:KP, :]                                 # (KP, EP)  bf16
    wfc = w_ref[KP:KP + EP, :]                             # (EP, OUT) bf16
    bconv = b_ref[0:1, :]                                  # (1, EP)   f32
    bfc = b_ref[1:2, :]                                    # (1, OUT)  f32

    # One batched conv-as-matmul for all NB images (M=1024 feeds the MXU well),
    # f32 accumulation, bias + ReLU on the VPU.
    conv = jnp.dot(x, wconv, preferred_element_type=jnp.float32)   # (NBHW, EP)
    conv = jnp.maximum(conv + bconv, 0.0)

    # Global average pool per image: 2D cross-sublane reductions (XLU) into an
    # 8-row, sublane-aligned f32 scratch; rows NB..7 stay zero.
    pooled_ref[...] = jnp.zeros_like(pooled_ref)
    for i in range(NB):                                    # static unroll (NB=4)
        pooled_ref[i:i + 1, :] = (
            jnp.sum(conv[i * HW:(i + 1) * HW, :], axis=0, keepdims=True)
            * (1.0 / HW))

    # fc for all images in ONE (8,EP)x(EP,OUT) MXU matmul (padded wfc rows = 0).
    emb = jnp.dot(pooled_ref[...].astype(jnp.bfloat16), wfc,
                  preferred_element_type=jnp.float32) + bfc         # (8, OUT)

    # Zero the padding rows so the slab is exactly [embeddings; 0] and emit a
    # single lane-dense, unmasked (8,128) store -> one writeback DMA.
    row = jax.lax.broadcasted_iota(jnp.int32, (OUT_ROWS, OUT), 0)
    out_ref[...] = jnp.where(row < NB, emb, 0.0)


def _im2col(imgs_nchw):
    """(N,C,H,W) -> (N*H*W, C*KH*KW) SAME(pad=1) 3x3 patches, (kh,kw,c) order."""
    n = imgs_nchw.shape[0]
    x = jnp.transpose(imgs_nchw, (0, 2, 3, 1))             # NHWC
    xp = jnp.pad(x, ((0, 0), (1, 1), (1, 1), (0, 0)))
    pats = [xp[:, di:di + H, dj:dj + W, :]
            for di in range(KH) for dj in range(KW)]
    patches = jnp.concatenate(pats, axis=-1)               # (N, H, W, KH*KW*C)
    return patches.reshape(n * HW, K)


@jax.jit
def siamese_forward(img1, img2, w_slab, b_slab):
    # Shared weights -> stack both batches: one im2col, one pad+cast
    # materialization, one kernel launch for the whole forward().
    imgs = jnp.concatenate([img1, img2], axis=0)                      # (NB,C,H,W)
    patches = _im2col(imgs)                                           # (NBHW, K)
    patches = jnp.pad(patches.astype(jnp.bfloat16), ((0, 0), (0, KP - K)))

    out = pl.pallas_call(
        _siamese_kernel,
        out_shape=jax.ShapeDtypeStruct((OUT_ROWS, OUT), jnp.float32),
        grid_spec=pltpu.PrefetchScalarGridSpec(
            num_scalar_prefetch=0,
            grid=(1,),   # single step: these shapes are per-step-overhead bound
            in_specs=[
                # all patch rows at once (1024, 128) bf16
                pl.BlockSpec((NBHW, KP), lambda i: (0, 0)),
                # packed weight slab: rows [0,KP)=wconv, rows [KP,KP+EP)=wfc
                pl.BlockSpec((KP + EP, OUT), lambda i: (0, 0)),
                # packed biases: row 0 = conv bias (padded), row 1 = fc bias
                pl.BlockSpec((2, OUT), lambda i: (0, 0)),
            ],
            out_specs=pl.BlockSpec((OUT_ROWS, OUT), lambda i: (0, 0)),
            scratch_shapes=[pltpu.VMEM((OUT_ROWS, EP), jnp.float32)],
        ),
        compiler_params=pltpu.CompilerParams(
            dimension_semantics=("arbitrary",)),
    )(patches, w_slab, b_slab)

    emb = out[:NB]                     # drop the zero padding rows
    return emb[:B], emb[B:]


def init_params(key):
    k1, k2, k3, k4 = jax.random.split(key, 4)
    wconv = jax.random.normal(k1, (K, EMB), jnp.float32) * 0.1
    bconv = jax.random.normal(k2, (EMB,), jnp.float32) * 0.1
    wfc = jax.random.normal(k3, (EMB, OUT), jnp.float32) * 0.1
    bfc = jax.random.normal(k4, (OUT,), jnp.float32) * 0.1
    return wconv, bconv, wfc, bfc


def pack_params(wconv, bconv, wfc, bfc):
    """Zero-pad K->KP / EMB->EP and pack into two lane-dense slabs."""
    wconv_p = jnp.zeros((KP, EP), jnp.float32).at[:K, :EMB].set(wconv)
    wfc_p = jnp.zeros((EP, OUT), jnp.float32).at[:EMB, :].set(wfc)
    w_slab = jnp.concatenate([wconv_p, wfc_p], axis=0).astype(jnp.bfloat16)  # (256,128)
    bconv_p = jnp.zeros((1, EP), jnp.float32).at[0, :EMB].set(bconv)
    b_slab = jnp.concatenate([bconv_p, bfc.reshape(1, OUT)], axis=0)          # (2,128)
    return w_slab, b_slab


def reference_forward(img1, img2, wconv, bconv, wfc, bfc):
    """Pure-JAX f32 reference of the same (approximated) forward pass."""
    imgs = jnp.concatenate([img1, img2], axis=0)
    patches = _im2col(imgs)                                     # (NBHW, K) f32
    conv = jnp.maximum(patches @ wconv + bconv[None, :], 0.0)   # (NBHW, EMB)
    pooled = conv.reshape(NB, HW, EMB).mean(axis=1)             # (NB, EMB)
    emb = pooled @ wfc + bfc[None, :]                           # (NB, OUT)
    return emb[:B], emb[B:]


if __name__ == "__main__":
    key = jax.random.PRNGKey(0)
    kp, ki1, ki2 = jax.random.split(key, 3)
    wconv, bconv, wfc, bfc = init_params(kp)
    w_slab, b_slab = pack_params(wconv, bconv, wfc, bfc)
    img1 = jax.random.normal(ki1, (B, C_IN, H, W), jnp.float32)
    img2 = jax.random.normal(ki2, (B, C_IN, H, W), jnp.float32)

    emb1, emb2 = siamese_forward(img1, img2, w_slab, b_slab)
    jax.block_until_ready((emb1, emb2))
    assert emb1.shape == (B, OUT) and emb2.shape == (B, OUT)

    # bf16 MXU inputs vs f32 reference -> loose tolerance (expected err ~1e-2).
    r1, r2 = reference_forward(img1, img2, wconv, bconv, wfc, bfc)
    err = max(float(jnp.max(jnp.abs(emb1 - r1))),
              float(jnp.max(jnp.abs(emb2 - r2))))
    assert err < 5e-2, f"mismatch vs reference: max abs err = {err}"
    print("KERNEL_OK")
</pallas_src>

<mosaic_0001>
module attributes {stable_mosaic.version = 11 : i64} {
  func.func @_siamese_kernel(%arg0: i32, %arg1: memref<1024x128xbf16, #tpu.memory_space<vmem>>, %arg2: memref<256x128xbf16, #tpu.memory_space<vmem>>, %arg3: memref<2x128xf32, #tpu.memory_space<vmem>>, %arg4: memref<8x128xf32, #tpu.memory_space<vmem>>, %arg5: memref<8x128xf32, #tpu.memory_space<vmem>>) attributes {dimension_semantics = [#tpu.dimension_semantics<arbitrary>], iteration_bounds = array<i64: 1>, scalar_prefetch = 0 : i64, scratch_operands = 1 : i64, tpu.core_type = #tpu.core_type<tc>, window_params = [{pipeline_mode = #tpu.pipeline_mode<synchronous>, transform_indices = @transform_0, window_bounds = array<i64: 1024, 128>}, {pipeline_mode = #tpu.pipeline_mode<synchronous>, transform_indices = @transform_1, window_bounds = array<i64: 256, 128>}, {pipeline_mode = #tpu.pipeline_mode<synchronous>, transform_indices = @transform_2, window_bounds = array<i64: 2, 128>}, {pipeline_mode = #tpu.pipeline_mode<synchronous>, transform_indices = @transform_3, window_bounds = array<i64: 8, 128>}]} {
    %c0 = arith.constant 0 : index
    %c0_0 = arith.constant 0 : index
    %0 = vector.load %arg1[%c0, %c0_0] : memref<1024x128xbf16, #tpu.memory_space<vmem>>, vector<1024x128xbf16>
    %c0_1 = arith.constant 0 : index
    %c0_2 = arith.constant 0 : index
    %1 = vector.load %arg2[%c0_1, %c0_2] : memref<256x128xbf16, #tpu.memory_space<vmem>>, vector<128x128xbf16>
    %c128 = arith.constant 128 : index
    %c0_3 = arith.constant 0 : index
    %2 = vector.load %arg2[%c128, %c0_3] : memref<256x128xbf16, #tpu.memory_space<vmem>>, vector<128x128xbf16>
    %c0_4 = arith.constant 0 : index
    %c0_5 = arith.constant 0 : index
    %3 = vector.load %arg3[%c0_4, %c0_5] : memref<2x128xf32, #tpu.memory_space<vmem>>, vector<1x128xf32>
    %c1 = arith.constant 1 : index
    %c0_6 = arith.constant 0 : index
    %4 = vector.load %arg3[%c1, %c0_6] : memref<2x128xf32, #tpu.memory_space<vmem>>, vector<1x128xf32>
    %cst = arith.constant dense<0.000000e+00> : vector<1024x128xf32>
    %5 = tpu.matmul %0, %1, %cst {dimension_numbers = #tpu.dot_dimension_numbers<[1], [0], [0], [1], [0, 0, 1, 1], [], []>} : vector<1024x128xbf16>, vector<128x128xbf16>, vector<1024x128xf32> -> vector<1024x128xf32>
    %6 = vector.broadcast %3 : vector<1x128xf32> to vector<1024x128xf32>
    %7 = arith.addf %5, %6 : vector<1024x128xf32>
    %cst_7 = arith.constant 0.000000e+00 : f32
    %8 = vector.broadcast %cst_7 : f32 to vector<1024x128xf32>
    %9 = arith.maximumf %7, %8 : vector<1024x128xf32>
    %cst_8 = arith.constant 0.000000e+00 : f32
    %10 = vector.broadcast %cst_8 : f32 to vector<8x128xf32>
    %c0_9 = arith.constant 0 : index
    %c0_10 = arith.constant 0 : index
    %11 = vector.load %arg5[%c0_9, %c0_10] : memref<8x128xf32, #tpu.memory_space<vmem>>, vector<8x128xf32>
    tpu.vector_store %arg5[%c0_9, %c0_10], %10 {strides = array<i32>} : memref<8x128xf32, #tpu.memory_space<vmem>>, vector<8x128xf32>,
    %12 = vector.extract_strided_slice %9 {offsets = [0, 0], sizes = [256, 128], strides = [1, 1]} : vector<1024x128xf32> to vector<256x128xf32>
    %cst_11 = arith.constant dense<0.000000e+00> : vector<128xf32>
    %13 = vector.multi_reduction <add>, %12, %cst_11 [0] : vector<256x128xf32> to vector<128xf32>
    %14 = vector.shape_cast %13 : vector<128xf32> to vector<1x128xf32>
    %cst_12 = arith.constant 3.906250e-03 : f32
    %15 = vector.broadcast %cst_12 : f32 to vector<1x128xf32>
    %16 = arith.mulf %14, %15 : vector<1x128xf32>
    %c0_13 = arith.constant 0 : index
    %c0_14 = arith.constant 0 : index
    %17 = vector.load %arg5[%c0_13, %c0_14] : memref<8x128xf32, #tpu.memory_space<vmem>>, vector<1x128xf32>
    tpu.vector_store %arg5[%c0_13, %c0_14], %16 {strides = array<i32>} : memref<8x128xf32, #tpu.memory_space<vmem>>, vector<1x128xf32>,
    %18 = vector.extract_strided_slice %9 {offsets = [256, 0], sizes = [256, 128], strides = [1, 1]} : vector<1024x128xf32> to vector<256x128xf32>
    %cst_15 = arith.constant dense<0.000000e+00> : vector<128xf32>
    %19 = vector.multi_reduction <add>, %18, %cst_15 [0] : vector<256x128xf32> to vector<128xf32>
    %20 = vector.shape_cast %19 : vector<128xf32> to vector<1x128xf32>
    %cst_16 = arith.constant 3.906250e-03 : f32
    %21 = vector.broadcast %cst_16 : f32 to vector<1x128xf32>
    %22 = arith.mulf %20, %21 : vector<1x128xf32>
    %c1_17 = arith.constant 1 : index
    %c0_18 = arith.constant 0 : index
    %23 = vector.load %arg5[%c1_17, %c0_18] : memref<8x128xf32, #tpu.memory_space<vmem>>, vector<1x128xf32>
    tpu.vector_store %arg5[%c1_17, %c0_18], %22 {strides = array<i32>} : memref<8x128xf32, #tpu.memory_space<vmem>>, vector<1x128xf32>,
    %24 = vector.extract_strided_slice %9 {offsets = [512, 0], sizes = [256, 128], strides = [1, 1]} : vector<1024x128xf32> to vector<256x128xf32>
    %cst_19 = arith.constant dense<0.000000e+00> : vector<128xf32>
    %25 = vector.multi_reduction <add>, %24, %cst_19 [0] : vector<256x128xf32> to vector<128xf32>
    %26 = vector.shape_cast %25 : vector<128xf32> to vector<1x128xf32>
    %cst_20 = arith.constant 3.906250e-03 : f32
    %27 = vector.broadcast %cst_20 : f32 to vector<1x128xf32>
    %28 = arith.mulf %26, %27 : vector<1x128xf32>
    %c2 = arith.constant 2 : index
    %c0_21 = arith.constant 0 : index
    %29 = vector.load %arg5[%c2, %c0_21] : memref<8x128xf32, #tpu.memory_space<vmem>>, vector<1x128xf32>
    tpu.vector_store %arg5[%c2, %c0_21], %28 {strides = array<i32>} : memref<8x128xf32, #tpu.memory_space<vmem>>, vector<1x128xf32>,
    %30 = vector.extract_strided_slice %9 {offsets = [768, 0], sizes = [256, 128], strides = [1, 1]} : vector<1024x128xf32> to vector<256x128xf32>
    %cst_22 = arith.constant dense<0.000000e+00> : vector<128xf32>
    %31 = vector.multi_reduction <add>, %30, %cst_22 [0] : vector<256x128xf32> to vector<128xf32>
    %32 = vector.shape_cast %31 : vector<128xf32> to vector<1x128xf32>
    %cst_23 = arith.constant 3.906250e-03 : f32
    %33 = vector.broadcast %cst_23 : f32 to vector<1x128xf32>
    %34 = arith.mulf %32, %33 : vector<1x128xf32>
    %c3 = arith.constant 3 : index
    %c0_24 = arith.constant 0 : index
    %35 = vector.load %arg5[%c3, %c0_24] : memref<8x128xf32, #tpu.memory_space<vmem>>, vector<1x128xf32>
    tpu.vector_store %arg5[%c3, %c0_24], %34 {strides = array<i32>} : memref<8x128xf32, #tpu.memory_space<vmem>>, vector<1x128xf32>,
    %c0_25 = arith.constant 0 : index
    %c0_26 = arith.constant 0 : index
    %36 = vector.load %arg5[%c0_25, %c0_26] : memref<8x128xf32, #tpu.memory_space<vmem>>, vector<8x128xf32>
    %37 = arith.truncf %36 : vector<8x128xf32> to vector<8x128xbf16>
    %cst_27 = arith.constant dense<0.000000e+00> : vector<8x128xf32>
    %38 = tpu.matmul %37, %2, %cst_27 {dimension_numbers = #tpu.dot_dimension_numbers<[1], [0], [0], [1], [0, 0, 1, 1], [], []>} : vector<8x128xbf16>, vector<128x128xbf16>, vector<8x128xf32> -> vector<8x128xf32>
    %39 = vector.broadcast %4 : vector<1x128xf32> to vector<8x128xf32>
    %40 = arith.addf %38, %39 : vector<8x128xf32>
    %41 = tpu.iota {dimensions = array<i32: 0>} : vector<8x128xi32>
    %c4_i32 = arith.constant 4 : i32
    %42 = vector.broadcast %c4_i32 : i32 to vector<8x128xi32>
    %43 = arith.cmpi slt, %41, %42 : vector<8x128xi32>
    %cst_28 = arith.constant 0.000000e+00 : f32
    %44 = vector.broadcast %cst_28 : f32 to vector<8x128xf32>
    %45 = arith.select %43, %40, %44 : vector<8x128xi1>, vector<8x128xf32>
    %c0_29 = arith.constant 0 : index
    %c0_30 = arith.constant 0 : index
    %46 = vector.load %arg4[%c0_29, %c0_30] : memref<8x128xf32, #tpu.memory_space<vmem>>, vector<8x128xf32>
    tpu.vector_store %arg4[%c0_29, %c0_30], %45 {strides = array<i32>} : memref<8x128xf32, #tpu.memory_space<vmem>>, vector<8x128xf32>,
    return
  }
  func.func @transform_0(%arg0: i32) -> (i32, i32) {
    %c0_i32 = arith.constant 0 : i32
    %c0_i32_0 = arith.constant 0 : i32
    %c0_i32_1 = arith.constant 0 : i32
    return %c0_i32, %c0_i32_0 : i32, i32
  }
  func.func @transform_1(%arg0: i32) -> (i32, i32) {
    %c0_i32 = arith.constant 0 : i32
    %c0_i32_0 = arith.constant 0 : i32
    %c0_i32_1 = arith.constant 0 : i32
    return %c0_i32, %c0_i32_0 : i32, i32
  }
  func.func @transform_2(%arg0: i32) -> (i32, i32) {
    %c0_i32 = arith.constant 0 : i32
    %c0_i32_0 = arith.constant 0 : i32
    %c0_i32_1 = arith.constant 0 : i32
    return %c0_i32, %c0_i32_0 : i32, i32
  }
  func.func @transform_3(%arg0: i32) -> (i32, i32) {
    %c0_i32 = arith.constant 0 : i32
    %c0_i32_0 = arith.constant 0 : i32
    %c0_i32_1 = arith.constant 0 : i32
    return %c0_i32, %c0_i32_0 : i32, i32
  }
}

</mosaic_0001>

<llo_original>
// kernel: siamese_forward.1
$region0: #{siamese_forward.1}
  #allocation0 [shape = 'u32[]', space=smem, size = 0x4, offset = 0x4, fixed_abs, tag = 'smem constant byte address 0x4 - core index']
  #allocation1 [shape = 'u32[72,128]{1,0:T(1,128)}', space=vmem, size = 0x9000, scoped, tag = 'internal scratch']
  #allocation2 [shape = 'f32[8,128]{1,0:T(8,128)}', space=vmem, size = 0x1000, scoped, tag = 'scratch operand']
  %s0 = inlined_call_operand.vmem [shape: bf16[1024,128], index: 0, kind: input, shape index: {}]
  %s1 = inlined_call_operand.vmem [shape: bf16[256,128], index: 1, kind: input, shape index: {}]
  %s2 = inlined_call_operand.vmem [shape: f32[2,128], index: 2, kind: input, shape index: {}]
  %s3 = inlined_call_operand.vmem [shape: f32[8,128], index: 3, kind: output, shape index: {}]
  %s4 = sld [smem:[#allocation0]]
  $region22: #{siamese_forward.1} parent=0
    _
  %s6 = ssub.s32 1, %s4
  %s7 = scalar_select 0, %s6, %s4
  // Predicated region
  $region2: #{siamese_forward.1} parent=0 // pred_check
    _
  $region3: #{siamese_forward.1} parent=0 // pred_check_branch
    %9 = sbr.rel (0) target = $region5
  $region4: #{siamese_forward.1} parent=0 // pred_region
    _
  $region5: #{siamese_forward.1} parent=0 // pred_fallthru
    _
  // Predicated region
  $region6: #{siamese_forward.1} parent=0 // pred_check
    _
  $region7: #{siamese_forward.1} parent=0 // pred_check_branch
    %11 = sbr.rel (0) target = $region9
  $region8: #{siamese_forward.1} parent=0 // pred_region
    _
  $region9: #{siamese_forward.1} parent=0 // pred_fallthru
    _
  // Predicated region
  $region10: #{siamese_forward.1} parent=0 // pred_check
    _
  $region11: #{siamese_forward.1} parent=0 // pred_check_branch
    %13 = sbr.rel (0) target = $region13
  $region12: #{siamese_forward.1} parent=0 // pred_region
    _
  $region13: #{siamese_forward.1} parent=0 // pred_fallthru
    _
  %v14 = vld [vmem:[%s0] sm:$0xf]
  %v15 = vld [vmem:[%s0 + $0x4] sm:$0xf]
  %v16 = vld [vmem:[%s0 + $0x8] sm:$0xf]
  %v17 = vld [vmem:[%s0 + $0xc] sm:$0xf]
  %v18 = vld [vmem:[%s0 + $0x10] sm:$0xf]
  %v19 = vld [vmem:[%s0 + $0x14] sm:$0xf]
  %v20 = vld [vmem:[%s0 + $0x18] sm:$0xf]
  %v21 = vld [vmem:[%s0 + $0x1c] sm:$0xf]
  %v22 = vld [vmem:[%s0 + $0x20] sm:$0xf]
  %v23 = vld [vmem:[%s0 + $0x24] sm:$0xf]
  %v24 = vld [vmem:[%s0 + $0x28] sm:$0xf]
  %v25 = vld [vmem:[%s0 + $0x2c] sm:$0xf]
  %v26 = vld [vmem:[%s0 + $0x30] sm:$0xf]
  %v27 = vld [vmem:[%s0 + $0x34] sm:$0xf]
  %v28 = vld [vmem:[%s0 + $0x38] sm:$0xf]
  %v29 = vld [vmem:[%s0 + $0x3c] sm:$0xf]
  %v30 = vld [vmem:[%s0 + $0x40] sm:$0xf]
  %v31 = vld [vmem:[%s0 + $0x44] sm:$0xf]
  %v32 = vld [vmem:[%s0 + $0x48] sm:$0xf]
  %v33 = vld [vmem:[%s0 + $0x4c] sm:$0xf]
  %v34 = vld [vmem:[%s0 + $0x50] sm:$0xf]
  %v35 = vld [vmem:[%s0 + $0x54] sm:$0xf]
  %v36 = vld [vmem:[%s0 + $0x58] sm:$0xf]
  %v37 = vld [vmem:[%s0 + $0x5c] sm:$0xf]
  %v38 = vld [vmem:[%s0 + $0x60] sm:$0xf]
  %v39 = vld [vmem:[%s0 + $0x64] sm:$0xf]
  %v40 = vld [vmem:[%s0 + $0x68] sm:$0xf]
  %v41 = vld [vmem:[%s0 + $0x6c] sm:$0xf]
  %v42 = vld [vmem:[%s0 + $0x70] sm:$0xf]
  %v43 = vld [vmem:[%s0 + $0x74] sm:$0xf]
  %v44 = vld [vmem:[%s0 + $0x78] sm:$0xf]
  %v45 = vld [vmem:[%s0 + $0x7c] sm:$0xf]
  %v46 = vld [vmem:[%s0 + $0x80] sm:$0xf]
  %v47 = vld [vmem:[%s0 + $0x84] sm:$0xf]
  %v48 = vld [vmem:[%s0 + $0x88] sm:$0xf]
  %v49 = vld [vmem:[%s0 + $0x8c] sm:$0xf]
  %v50 = vld [vmem:[%s0 + $0x90] sm:$0xf]
  %v51 = vld [vmem:[%s0 + $0x94] sm:$0xf]
  %v52 = vld [vmem:[%s0 + $0x98] sm:$0xf]
  %v53 = vld [vmem:[%s0 + $0x9c] sm:$0xf]
  %v54 = vld [vmem:[%s0 + $0xa0] sm:$0xf]
  %v55 = vld [vmem:[%s0 + $0xa4] sm:$0xf]
  %v56 = vld [vmem:[%s0 + $0xa8] sm:$0xf]
  %v57 = vld [vmem:[%s0 + $0xac] sm:$0xf]
  %v58 = vld [vmem:[%s0 + $0xb0] sm:$0xf]
  %v59 = vld [vmem:[%s0 + $0xb4] sm:$0xf]
  %v60 = vld [vmem:[%s0 + $0xb8] sm:$0xf]
  %v61 = vld [vmem:[%s0 + $0xbc] sm:$0xf]
  %v62 = vld [vmem:[%s0 + $0xc0] sm:$0xf]
  %v63 = vld [vmem:[%s0 + $0xc4] sm:$0xf]
  %v64 = vld [vmem:[%s0 + $0xc8] sm:$0xf]
  %v65 = vld [vmem:[%s0 + $0xcc] sm:$0xf]
  %v66 = vld [vmem:[%s0 + $0xd0] sm:$0xf]
  %v67 = vld [vmem:[%s0 + $0xd4] sm:$0xf]
  %v68 = vld [vmem:[%s0 + $0xd8] sm:$0xf]
  %v69 = vld [vmem:[%s0 + $0xdc] sm:$0xf]
  %v70 = vld [vmem:[%s0 + $0xe0] sm:$0xf]
  %v71 = vld [vmem:[%s0 + $0xe4] sm:$0xf]
  %v72 = vld [vmem:[%s0 + $0xe8] sm:$0xf]
  %v73 = vld [vmem:[%s0 + $0xec] sm:$0xf]
  %v74 = vld [vmem:[%s0 + $0xf0] sm:$0xf]
  %v75 = vld [vmem:[%s0 + $0xf4] sm:$0xf]
  %v76 = vld [vmem:[%s0 + $0xf8] sm:$0xf]
  %v77 = vld [vmem:[%s0 + $0xfc] sm:$0xf]
  %v78 = vld [vmem:[%s0 + $0x100] sm:$0xf]
  %v79 = vld [vmem:[%s0 + $0x104] sm:$0xf]
  %v80 = vld [vmem:[%s0 + $0x108] sm:$0xf]
  %v81 = vld [vmem:[%s0 + $0x10c] sm:$0xf]
  %v82 = vld [vmem:[%s0 + $0x110] sm:$0xf]
  %v83 = vld [vmem:[%s0 + $0x114] sm:$0xf]
  %v84 = vld [vmem:[%s0 + $0x118] sm:$0xf]
  %v85 = vld [vmem:[%s0 + $0x11c] sm:$0xf]
  %v86 = vld [vmem:[%s0 + $0x120] sm:$0xf]
  %v87 = vld [vmem:[%s0 + $0x124] sm:$0xf]
  %v88 = vld [vmem:[%s0 + $0x128] sm:$0xf]
  %v89 = vld [vmem:[%s0 + $0x12c] sm:$0xf]
  %v90 = vld [vmem:[%s0 + $0x130] sm:$0xf]
  %v91 = vld [vmem:[%s0 + $0x134] sm:$0xf]
  %v92 = vld [vmem:[%s0 + $0x138] sm:$0xf]
  %v93 = vld [vmem:[%s0 + $0x13c] sm:$0xf]
  %v94 = vld [vmem:[%s0 + $0x140] sm:$0xf]
  %v95 = vld [vmem:[%s0 + $0x144] sm:$0xf]
  %v96 = vld [vmem:[%s0 + $0x148] sm:$0xf]
  %v97 = vld [vmem:[%s0 + $0x14c] sm:$0xf]
  %v98 = vld [vmem:[%s0 + $0x150] sm:$0xf]
  %v99 = vld [vmem:[%s0 + $0x154] sm:$0xf]
  %v100 = vld [vmem:[%s0 + $0x158] sm:$0xf]
  %v101 = vld [vmem:[%s0 + $0x15c] sm:$0xf]
  %v102 = vld [vmem:[%s0 + $0x160] sm:$0xf]
  %v103 = vld [vmem:[%s0 + $0x164] sm:$0xf]
  %v104 = vld [vmem:[%s0 + $0x168] sm:$0xf]
  %v105 = vld [vmem:[%s0 + $0x16c] sm:$0xf]
  %v106 = vld [vmem:[%s0 + $0x170] sm:$0xf]
  %v107 = vld [vmem:[%s0 + $0x174] sm:$0xf]
  %v108 = vld [vmem:[%s0 + $0x178] sm:$0xf]
  %v109 = vld [vmem:[%s0 + $0x17c] sm:$0xf]
  %v110 = vld [vmem:[%s0 + $0x180] sm:$0xf]
  %v111 = vld [vmem:[%s0 + $0x184] sm:$0xf]
  %v112 = vld [vmem:[%s0 + $0x188] sm:$0xf]
  %v113 = vld [vmem:[%s0 + $0x18c] sm:$0xf]
  %v114 = vld [vmem:[%s0 + $0x190] sm:$0xf]
  %v115 = vld [vmem:[%s0 + $0x194] sm:$0xf]
  %v116 = vld [vmem:[%s0 + $0x198] sm:$0xf]
  %v117 = vld [vmem:[%s0 + $0x19c] sm:$0xf]
  %v118 = vld [vmem:[%s0 + $0x1a0] sm:$0xf]
  %v119 = vld [vmem:[%s0 + $0x1a4] sm:$0xf]
  %v120 = vld [vmem:[%s0 + $0x1a8] sm:$0xf]
  %v121 = vld [vmem:[%s0 + $0x1ac] sm:$0xf]
  %v122 = vld [vmem:[%s0 + $0x1b0] sm:$0xf]
  %v123 = vld [vmem:[%s0 + $0x1b4] sm:$0xf]
  %v124 = vld [vmem:[%s0 + $0x1b8] sm:$0xf]
  %v125 = vld [vmem:[%s0 + $0x1bc] sm:$0xf]
  %v126 = vld [vmem:[%s0 + $0x1c0] sm:$0xf]
  %v127 = vld [vmem:[%s0 + $0x1c4] sm:$0xf]
  %v128 = vld [vmem:[%s0 + $0x1c8] sm:$0xf]
  %v129 = vld [vmem:[%s0 + $0x1cc] sm:$0xf]
  %v130 = vld [vmem:[%s0 + $0x1d0] sm:$0xf]
  %v131 = vld [vmem:[%s0 + $0x1d4] sm:$0xf]
  %v132 = vld [vmem:[%s0 + $0x1d8] sm:$0xf]
  %v133 = vld [vmem:[%s0 + $0x1dc] sm:$0xf]
  %v134 = vld [vmem:[%s0 + $0x1e0] sm:$0xf]
  %v135 = vld [vmem:[%s0 + $0x1e4] sm:$0xf]
  %v136 = vld [vmem:[%s0 + $0x1e8] sm:$0xf]
  %v137 = vld [vmem:[%s0 + $0x1ec] sm:$0xf]
  %v138 = vld [vmem:[%s0 + $0x1f0] sm:$0xf]
  %v139 = vld [vmem:[%s0 + $0x1f4] sm:$0xf]
  %v140 = vld [vmem:[%s0 + $0x1f8] sm:$0xf]
  %v141 = vld [vmem:[%s0 + $0x1fc] sm:$0xf]
  %v142 = vld [vmem:[%s1] sm:$0xf]
  %v143 = vld [vmem:[%s1 + $0x4] sm:$0xf]
  %v144 = vld [vmem:[%s1 + $0x8] sm:$0xf]
  %v145 = vld [vmem:[%s1 + $0xc] sm:$0xf]
  %v146 = vld [vmem:[%s1 + $0x10] sm:$0xf]
  %v147 = vld [vmem:[%s1 + $0x14] sm:$0xf]
  %v148 = vld [vmem:[%s1 + $0x18] sm:$0xf]
  %v149 = vld [vmem:[%s1 + $0x1c] sm:$0xf]
  %v150 = vld [vmem:[%s1 + $0x20] sm:$0xf]
  %v151 = vld [vmem:[%s1 + $0x24] sm:$0xf]
  %v152 = vld [vmem:[%s1 + $0x28] sm:$0xf]
  %v153 = vld [vmem:[%s1 + $0x2c] sm:$0xf]
  %v154 = vld [vmem:[%s1 + $0x30] sm:$0xf]
  %v155 = vld [vmem:[%s1 + $0x34] sm:$0xf]
  %v156 = vld [vmem:[%s1 + $0x38] sm:$0xf]
  %v157 = vld [vmem:[%s1 + $0x3c] sm:$0xf]
  %v158 = vld [vmem:[%s1 + $0x40] sm:$0xf]
  %v159 = vld [vmem:[%s1 + $0x44] sm:$0xf]
  %v160 = vld [vmem:[%s1 + $0x48] sm:$0xf]
  %v161 = vld [vmem:[%s1 + $0x4c] sm:$0xf]
  %v162 = vld [vmem:[%s1 + $0x50] sm:$0xf]
  %v163 = vld [vmem:[%s1 + $0x54] sm:$0xf]
  %v164 = vld [vmem:[%s1 + $0x58] sm:$0xf]
  %v165 = vld [vmem:[%s1 + $0x5c] sm:$0xf]
  %v166 = vld [vmem:[%s1 + $0x60] sm:$0xf]
  %v167 = vld [vmem:[%s1 + $0x64] sm:$0xf]
  %v168 = vld [vmem:[%s1 + $0x68] sm:$0xf]
  %v169 = vld [vmem:[%s1 + $0x6c] sm:$0xf]
  %v170 = vld [vmem:[%s1 + $0x70] sm:$0xf]
  %v171 = vld [vmem:[%s1 + $0x74] sm:$0xf]
  %v172 = vld [vmem:[%s1 + $0x78] sm:$0xf]
  %v173 = vld [vmem:[%s1 + $0x7c] sm:$0xf]
  %v174 = vld [vmem:[%s2] sm:$0x1]
  %v175 = vld [vmem:[%s2 + $0x1] sm:$0x1]
  %v176 = vperm.slane %v174, 0
  %v305 = vunpack.c.l.b16 %v14
  %v306 = vunpack.c.l.b16 %v15
  %v307 = vunpack.c.l.b16 %v16
  %v308 = vunpack.c.l.b16 %v17
  %v309 = vunpack.c.l.b16 %v18
  %v310 = vunpack.c.l.b16 %v19
  %v311 = vunpack.c.l.b16 %v20
  %v312 = vunpack.c.l.b16 %v21
  %v313 = vunpack.c.l.b16 %v22
  %v314 = vunpack.c.l.b16 %v23
  %v315 = vunpack.c.l.b16 %v24
  %v316 = vunpack.c.l.b16 %v25
  %v317 = vunpack.c.l.b16 %v26
  %v318 = vunpack.c.l.b16 %v27
  %v319 = vunpack.c.l.b16 %v28
  %v320 = vunpack.c.l.b16 %v29
  %v321 = vunpack.c.l.b16 %v30
  %v322 = vunpack.c.l.b16 %v31
  %v323 = vunpack.c.l.b16 %v32
  %v324 = vunpack.c.l.b16 %v33
  %v325 = vunpack.c.l.b16 %v34
  %v326 = vunpack.c.l.b16 %v35
  %v327 = vunpack.c.l.b16 %v36
  %v328 = vunpack.c.l.b16 %v37
  %v329 = vunpack.c.l.b16 %v38
  %v330 = vunpack.c.l.b16 %v39
  %v331 = vunpack.c.l.b16 %v40
  %v332 = vunpack.c.l.b16 %v41
  %v333 = vunpack.c.l.b16 %v42
  %v334 = vunpack.c.l.b16 %v43
  %v335 = vunpack.c.l.b16 %v44
  %v336 = vunpack.c.l.b16 %v45
  %v337 = vunpack.c.l.b16 %v46
  %v338 = vunpack.c.l.b16 %v47
  %v339 = vunpack.c.l.b16 %v48
  %v340 = vunpack.c.l.b16 %v49
  %v341 = vunpack.c.l.b16 %v50
  %v342 = vunpack.c.l.b16 %v51
  %v343 = vunpack.c.l.b16 %v52
  %v344 = vunpack.c.l.b16 %v53
  %v345 = vunpack.c.l.b16 %v54
  %v346 = vunpack.c.l.b16 %v55
  %v347 = vunpack.c.l.b16 %v56
  %v348 = vunpack.c.l.b16 %v57
  %v349 = vunpack.c.l.b16 %v58
  %v350 = vunpack.c.l.b16 %v59
  %v351 = vunpack.c.l.b16 %v60
  %v352 = vunpack.c.l.b16 %v61
  %v353 = vunpack.c.l.b16 %v62
  %v354 = vunpack.c.l.b16 %v63
  %v355 = vunpack.c.l.b16 %v64
  %v356 = vunpack.c.l.b16 %v65
  %v357 = vunpack.c.l.b16 %v66
  %v358 = vunpack.c.l.b16 %v67
  %v359 = vunpack.c.l.b16 %v68
  %v360 = vunpack.c.l.b16 %v69
  %v361 = vunpack.c.l.b16 %v70
  %v362 = vunpack.c.l.b16 %v71
  %v363 = vunpack.c.l.b16 %v72
  %v364 = vunpack.c.l.b16 %v73
  %v365 = vunpack.c.l.b16 %v74
  %v366 = vunpack.c.l.b16 %v75
  %v367 = vunpack.c.l.b16 %v76
  %v368 = vunpack.c.l.b16 %v77
  %v369 = vunpack.c.l.b16 %v78
  %v370 = vunpack.c.l.b16 %v79
  %v371 = vunpack.c.l.b16 %v80
  %v372 = vunpack.c.l.b16 %v81
  %v373 = vunpack.c.l.b16 %v82
  %v374 = vunpack.c.l.b16 %v83
  %v375 = vunpack.c.l.b16 %v84
  %v376 = vunpack.c.l.b16 %v85
  %v377 = vunpack.c.l.b16 %v86
  %v378 = vunpack.c.l.b16 %v87
  %v379 = vunpack.c.l.b16 %v88
  %v380 = vunpack.c.l.b16 %v89
  %v381 = vunpack.c.l.b16 %v90
  %v382 = vunpack.c.l.b16 %v91
  %v383 = vunpack.c.l.b16 %v92
  %v384 = vunpack.c.l.b16 %v93
  %v385 = vunpack.c.l.b16 %v94
  %v386 = vunpack.c.l.b16 %v95
  %v387 = vunpack.c.l.b16 %v96
  %v388 = vunpack.c.l.b16 %v97
  %v389 = vunpack.c.l.b16 %v98
  %v390 = vunpack.c.l.b16 %v99
  %v391 = vunpack.c.l.b16 %v100
  %v392 = vunpack.c.l.b16 %v101
  %v393 = vunpack.c.l.b16 %v102
  %v394 = vunpack.c.l.b16 %v103
  %v395 = vunpack.c.l.b16 %v104
  %v396 = vunpack.c.l.b16 %v105
  %v397 = vunpack.c.l.b16 %v106
  %v398 = vunpack.c.l.b16 %v107
  %v399 = vunpack.c.l.b16 %v108
  %v400 = vunpack.c.l.b16 %v109
  %v401 = vunpack.c.l.b16 %v110
  %v402 = vunpack.c.l.b16 %v111
  %v403 = vunpack.c.l.b16 %v112
  %v404 = vunpack.c.l.b16 %v113
  %v405 = vunpack.c.l.b16 %v114
  %v406 = vunpack.c.l.b16 %v115
  %v407 = vunpack.c.l.b16 %v116
  %v408 = vunpack.c.l.b16 %v117
  %v409 = vunpack.c.l.b16 %v118
  %v410 = vunpack.c.l.b16 %v119
  %v411 = vunpack.c.l.b16 %v120
  %v412 = vunpack.c.l.b16 %v121
  %v413 = vunpack.c.l.b16 %v122
  %v414 = vunpack.c.l.b16 %v123
  %v415 = vunpack.c.l.b16 %v124
  %v416 = vunpack.c.l.b16 %v125
  %v417 = vunpack.c.l.b16 %v126
  %v418 = vunpack.c.l.b16 %v127
  %v419 = vunpack.c.l.b16 %v128
  %v420 = vunpack.c.l.b16 %v129
  %v421 = vunpack.c.l.b16 %v130
  %v422 = vunpack.c.l.b16 %v131
  %v423 = vunpack.c.l.b16 %v132
  %v424 = vunpack.c.l.b16 %v133
  %v425 = vunpack.c.l.b16 %v134
  %v426 = vunpack.c.l.b16 %v135
  %v427 = vunpack.c.l.b16 %v136
  %v428 = vunpack.c.l.b16 %v137
  %v429 = vunpack.c.l.b16 %v138
  %v430 = vunpack.c.l.b16 %v139
  %v431 = vunpack.c.l.b16 %v140
  %v432 = vunpack.c.l.b16 %v141
  %v433 = vpack.c.b16 %v306, %v305
  %v434 = vpack.c.b16 %v308, %v307
  %v435 = vpack.c.b16 %v310, %v309
  %v436 = vpack.c.b16 %v312, %v311
  %v437 = vpack.c.b16 %v314, %v313
  %v438 = vpack.c.b16 %v316, %v315
  %v439 = vpack.c.b16 %v318, %v317
  %v440 = vpack.c.b16 %v320, %v319
  %v441 = vpack.c.b16 %v322, %v321
  %v442 = vpack.c.b16 %v324, %v323
  %v443 = vpack.c.b16 %v326, %v325
  %v444 = vpack.c.b16 %v328, %v327
  %v445 = vpack.c.b16 %v330, %v329
  %v446 = vpack.c.b16 %v332, %v331
  %v447 = vpack.c.b16 %v334, %v333
  %v448 = vpack.c.b16 %v336, %v335
  %v449 = vpack.c.b16 %v338, %v337
  %v450 = vpack.c.b16 %v340, %v339
  %v451 = vpack.c.b16 %v342, %v341
  %v452 = vpack.c.b16 %v344, %v343
  %v453 = vpack.c.b16 %v346, %v345
  %v454 = vpack.c.b16 %v348, %v347
  %v455 = vpack.c.b16 %v350, %v349
  %v456 = vpack.c.b16 %v352, %v351
  %v457 = vpack.c.b16 %v354, %v353
  %v458 = vpack.c.b16 %v356, %v355
  %v459 = vpack.c.b16 %v358, %v357
  %v460 = vpack.c.b16 %v360, %v359
  %v461 = vpack.c.b16 %v362, %v361
  %v462 = vpack.c.b16 %v364, %v363
  %v463 = vpack.c.b16 %v366, %v365
  %v464 = vpack.c.b16 %v368, %v367
  %v465 = vpack.c.b16 %v370, %v369
  %v466 = vpack.c.b16 %v372, %v371
  %v467 = vpack.c.b16 %v374, %v373
  %v468 = vpack.c.b16 %v376, %v375
  %v469 = vpack.c.b16 %v378, %v377
  %v470 = vpack.c.b16 %v380, %v379
  %v471 = vpack.c.b16 %v382, %v381
  %v472 = vpack.c.b16 %v384, %v383
  %v473 = vpack.c.b16 %v386, %v385
  %v474 = vpack.c.b16 %v388, %v387
  %v475 = vpack.c.b16 %v390, %v389
  %v476 = vpack.c.b16 %v392, %v391
  %v477 = vpack.c.b16 %v394, %v393
  %v478 = vpack.c.b16 %v396, %v395
  %v479 = vpack.c.b16 %v398, %v397
  %v480 = vpack.c.b16 %v400, %v399
  %v481 = vpack.c.b16 %v402, %v401
  %v482 = vpack.c.b16 %v404, %v403
  %v483 = vpack.c.b16 %v406, %v405
  %v484 = vpack.c.b16 %v408, %v407
  %v485 = vpack.c.b16 %v410, %v409
  %v486 = vpack.c.b16 %v412, %v411
  %v487 = vpack.c.b16 %v414, %v413
  %v488 = vpack.c.b16 %v416, %v415
  %v489 = vpack.c.b16 %v418, %v417
  %v490 = vpack.c.b16 %v420, %v419
  %v491 = vpack.c.b16 %v422, %v421
  %v492 = vpack.c.b16 %v424, %v423
  %v493 = vpack.c.b16 %v426, %v425
  %v494 = vpack.c.b16 %v428, %v427
  %v495 = vpack.c.b16 %v430, %v429
  %v496 = vpack.c.b16 %v432, %v431
  %v577 = vunpack.c.l.b16 %v142
  %v578 = vunpack.c.l.b16 %v143
  %v579 = vunpack.c.l.b16 %v144
  %v580 = vunpack.c.l.b16 %v145
  %v581 = vunpack.c.l.b16 %v146
  %v582 = vunpack.c.l.b16 %v147
  %v583 = vunpack.c.l.b16 %v148
  %v584 = vunpack.c.l.b16 %v149
  %v585 = vunpack.c.l.b16 %v150
  %v586 = vunpack.c.l.b16 %v151
  %v587 = vunpack.c.l.b16 %v152
  %v588 = vunpack.c.l.b16 %v153
  %v589 = vunpack.c.l.b16 %v154
  %v590 = vunpack.c.l.b16 %v155
  %v591 = vunpack.c.l.b16 %v156
  %v592 = vunpack.c.l.b16 %v157
  %v593 = vpack.c.b16 %v578, %v577
  %v594 = vpack.c.b16 %v580, %v579
  %v595 = vpack.c.b16 %v582, %v581
  %v596 = vpack.c.b16 %v584, %v583
  %v597 = vpack.c.b16 %v586, %v585
  %v598 = vpack.c.b16 %v588, %v587
  %v599 = vpack.c.b16 %v590, %v589
  %v600 = vpack.c.b16 %v592, %v591
  %609 = vmatpush.bf16.msra.mxu0 %v600
  %610 = vmatpush.bf16.msra.mxu0 %v599
  %611 = vmatpush.bf16.msra.mxu0 %v598
  %612 = vmatpush.bf16.msra.mxu0 %v597
  %613 = vmatpush.bf16.msra.mxu0 %v596
  %614 = vmatpush.bf16.msra.mxu0 %v595
  %615 = vmatpush.bf16.msra.mxu0 %v594
  %616 = vmatpush.bf16.msra.mxu0 %v593
  %617 = vmatmul.bf16.gmra.mxu0 %v433
  %v618 = vpop.f32.mrf.mxu0
  %v619 = vadd.f32 %v176, %v618
  %v620 = vpop.f32.mrf.mxu0
  %v621 = vadd.f32 %v176, %v620
  %622 = vmatmul.bf16.gmra.mxu0 %v434
  %v623 = vpop.f32.mrf.mxu0
  %v624 = vadd.f32 %v176, %v623
  %v625 = vpop.f32.mrf.mxu0
  %v626 = vadd.f32 %v176, %v625
  %627 = vmatmul.bf16.gmra.mxu0 %v435
  %v628 = vpop.f32.mrf.mxu0
  %v629 = vadd.f32 %v176, %v628
  %v630 = vpop.f32.mrf.mxu0
  %v631 = vadd.f32 %v176, %v630
  %632 = vmatmul.bf16.gmra.mxu0 %v436
  %v633 = vpop.f32.mrf.mxu0
  %v634 = vadd.f32 %v176, %v633
  %v635 = vpop.f32.mrf.mxu0
  %v636 = vadd.f32 %v176, %v635
  %637 = vmatmul.bf16.gmra.mxu0 %v437
  %v638 = vpop.f32.mrf.mxu0
  %v639 = vadd.f32 %v176, %v638
  %v640 = vpop.f32.mrf.mxu0
  %v641 = vadd.f32 %v176, %v640
  %642 = vmatmul.bf16.gmra.mxu0 %v438
  %v643 = vpop.f32.mrf.mxu0
  %v644 = vadd.f32 %v176, %v643
  %v645 = vpop.f32.mrf.mxu0
  %v646 = vadd.f32 %v176, %v645
  %647 = vmatmul.bf16.gmra.mxu0 %v439
  %v648 = vpop.f32.mrf.mxu0
  %v649 = vadd.f32 %v176, %v648
  %v650 = vpop.f32.mrf.mxu0
  %v651 = vadd.f32 %v176, %v650
  %652 = vmatmul.bf16.gmra.mxu0 %v440
  %v653 = vpop.f32.mrf.mxu0
  %v654 = vadd.f32 %v176, %v653
  %v655 = vpop.f32.mrf.mxu0
  %v656 = vadd.f32 %v176, %v655
  %657 = vmatmul.bf16.gmra.mxu0 %v441
  %v658 = vpop.f32.mrf.mxu0
  %v659 = vadd.f32 %v176, %v658
  %v660 = vpop.f32.mrf.mxu0
  %v661 = vadd.f32 %v176, %v660
  %662 = vmatmul.bf16.gmra.mxu0 %v442
  %v663 = vpop.f32.mrf.mxu0
  %v664 = vadd.f32 %v176, %v663
  %v665 = vpop.f32.mrf.mxu0
  %v666 = vadd.f32 %v176, %v665
  %667 = vmatmul.bf16.gmra.mxu0 %v443
  %v668 = vpop.f32.mrf.mxu0
  %v669 = vadd.f32 %v176, %v668
  %v670 = vpop.f32.mrf.mxu0
  %v671 = vadd.f32 %v176, %v670
  %672 = vmatmul.bf16.gmra.mxu0 %v444
  %v673 = vpop.f32.mrf.mxu0
  %v674 = vadd.f32 %v176, %v673
  %v675 = vpop.f32.mrf.mxu0
  %v676 = vadd.f32 %v176, %v675
  %677 = vmatmul.bf16.gmra.mxu0 %v445
  %v678 = vpop.f32.mrf.mxu0
  %v679 = vadd.f32 %v176, %v678
  %v680 = vpop.f32.mrf.mxu0
  %v681 = vadd.f32 %v176, %v680
  %682 = vmatmul.bf16.gmra.mxu0 %v446
  %v683 = vpop.f32.mrf.mxu0
  %v684 = vadd.f32 %v176, %v683
  %v685 = vpop.f32.mrf.mxu0
  %v686 = vadd.f32 %v176, %v685
  %687 = vmatmul.bf16.gmra.mxu0 %v447
  %v688 = vpop.f32.mrf.mxu0
  %v689 = vadd.f32 %v176, %v688
  %v690 = vpop.f32.mrf.mxu0
  %v691 = vadd.f32 %v176, %v690
  %692 = vmatmul.bf16.gmra.mxu0 %v448
  %v693 = vpop.f32.mrf.mxu0
  %v694 = vadd.f32 %v176, %v693
  %v695 = vpop.f32.mrf.mxu0
  %v696 = vadd.f32 %v176, %v695
  %697 = vmatmul.bf16.gmra.mxu0 %v449
  %v698 = vpop.f32.mrf.mxu0
  %v699 = vadd.f32 %v176, %v698
  %v700 = vpop.f32.mrf.mxu0
  %v701 = vadd.f32 %v176, %v700
  %702 = vmatmul.bf16.gmra.mxu0 %v450
  %v703 = vpop.f32.mrf.mxu0
  %v704 = vadd.f32 %v176, %v703
  %v705 = vpop.f32.mrf.mxu0
  %v706 = vadd.f32 %v176, %v705
  %707 = vmatmul.bf16.gmra.mxu0 %v451
  %v708 = vpop.f32.mrf.mxu0
  %v709 = vadd.f32 %v176, %v708
  %v710 = vpop.f32.mrf.mxu0
  %v711 = vadd.f32 %v176, %v710
  %712 = vmatmul.bf16.gmra.mxu0 %v452
  %v713 = vpop.f32.mrf.mxu0
  %v714 = vadd.f32 %v176, %v713
  %v715 = vpop.f32.mrf.mxu0
  %v716 = vadd.f32 %v176, %v715
  %717 = vmatmul.bf16.gmra.mxu0 %v453
  %v718 = vpop.f32.mrf.mxu0
  %v719 = vadd.f32 %v176, %v718
  %v720 = vpop.f32.mrf.mxu0
  %v721 = vadd.f32 %v176, %v720
  %722 = vmatmul.bf16.gmra.mxu0 %v454
  %v723 = vpop.f32.mrf.mxu0
  %v724 = vadd.f32 %v176, %v723
  %v725 = vpop.f32.mrf.mxu0
  %v726 = vadd.f32 %v176, %v725
  %727 = vmatmul.bf16.gmra.mxu0 %v455
  %v728 = vpop.f32.mrf.mxu0
  %v729 = vadd.f32 %v176, %v728
  %v730 = vpop.f32.mrf.mxu0
  %v731 = vadd.f32 %v176, %v730
  %732 = vmatmul.bf16.gmra.mxu0 %v456
  %v733 = vpop.f32.mrf.mxu0
  %v734 = vadd.f32 %v176, %v733
  %v735 = vpop.f32.mrf.mxu0
  %v736 = vadd.f32 %v176, %v735
  %737 = vmatmul.bf16.gmra.mxu0 %v457
  %v738 = vpop.f32.mrf.mxu0
  %v739 = vadd.f32 %v176, %v738
  %v740 = vpop.f32.mrf.mxu0
  %v741 = vadd.f32 %v176, %v740
  %742 = vmatmul.bf16.gmra.mxu0 %v458
  %v743 = vpop.f32.mrf.mxu0
  %v744 = vadd.f32 %v176, %v743
  %v745 = vpop.f32.mrf.mxu0
  %v746 = vadd.f32 %v176, %v745
  %747 = vmatmul.bf16.gmra.mxu0 %v459
  %v748 = vpop.f32.mrf.mxu0
  %v749 = vadd.f32 %v176, %v748
  %v750 = vpop.f32.mrf.mxu0
  %v751 = vadd.f32 %v176, %v750
  %752 = vmatmul.bf16.gmra.mxu0 %v460
  %v753 = vpop.f32.mrf.mxu0
  %v754 = vadd.f32 %v176, %v753
  %v755 = vpop.f32.mrf.mxu0
  %v756 = vadd.f32 %v176, %v755
  %757 = vmatmul.bf16.gmra.mxu0 %v461
  %v758 = vpop.f32.mrf.mxu0
  %v759 = vadd.f32 %v176, %v758
  %v760 = vpop.f32.mrf.mxu0
  %v761 = vadd.f32 %v176, %v760
  %762 = vmatmul.bf16.gmra.mxu0 %v462
  %v763 = vpop.f32.mrf.mxu0
  %v764 = vadd.f32 %v176, %v763
  %v765 = vpop.f32.mrf.mxu0
  %v766 = vadd.f32 %v176, %v765
  %767 = vmatmul.bf16.gmra.mxu0 %v463
  %v768 = vpop.f32.mrf.mxu0
  %v769 = vadd.f32 %v176, %v768
  %v770 = vpop.f32.mrf.mxu0
  %v771 = vadd.f32 %v176, %v770
  %772 = vmatmul.bf16.gmra.mxu0 %v464
  %v773 = vpop.f32.mrf.mxu0
  %v774 = vadd.f32 %v176, %v773
  %v775 = vpop.f32.mrf.mxu0
  %v776 = vadd.f32 %v176, %v775
  %777 = vmatmul.bf16.gmra.mxu0 %v465
  %v778 = vpop.f32.mrf.mxu0
  %v779 = vadd.f32 %v176, %v778
  %v780 = vpop.f32.mrf.mxu0
  %v781 = vadd.f32 %v176, %v780
  %782 = vmatmul.bf16.gmra.mxu0 %v466
  %v783 = vpop.f32.mrf.mxu0
  %v784 = vadd.f32 %v176, %v783
  %v785 = vpop.f32.mrf.mxu0
  %v786 = vadd.f32 %v176, %v785
  %787 = vmatmul.bf16.gmra.mxu0 %v467
  %v788 = vpop.f32.mrf.mxu0
  %v789 = vadd.f32 %v176, %v788
  %v790 = vpop.f32.mrf.mxu0
  %v791 = vadd.f32 %v176, %v790
  %792 = vmatmul.bf16.gmra.mxu0 %v468
  %v793 = vpop.f32.mrf.mxu0
  %v794 = vadd.f32 %v176, %v793
  %v795 = vpop.f32.mrf.mxu0
  %v796 = vadd.f32 %v176, %v795
  %797 = vmatmul.bf16.gmra.mxu0 %v469
  %v798 = vpop.f32.mrf.mxu0
  %v799 = vadd.f32 %v176, %v798
  %v800 = vpop.f32.mrf.mxu0
  %v801 = vadd.f32 %v176, %v800
  %802 = vmatmul.bf16.gmra.mxu0 %v470
  %v803 = vpop.f32.mrf.mxu0
  %v804 = vadd.f32 %v176, %v803
  %v805 = vpop.f32.mrf.mxu0
  %v806 = vadd.f32 %v176, %v805
  %807 = vmatmul.bf16.gmra.mxu0 %v471
  %v808 = vpop.f32.mrf.mxu0
  %v809 = vadd.f32 %v176, %v808
  %v810 = vpop.f32.mrf.mxu0
  %v811 = vadd.f32 %v176, %v810
  %812 = vmatmul.bf16.gmra.mxu0 %v472
  %v813 = vpop.f32.mrf.mxu0
  %v814 = vadd.f32 %v176, %v813
  %v815 = vpop.f32.mrf.mxu0
  %v816 = vadd.f32 %v176, %v815
  %817 = vmatmul.bf16.gmra.mxu0 %v473
  %v818 = vpop.f32.mrf.mxu0
  %v819 = vadd.f32 %v176, %v818
  %v820 = vpop.f32.mrf.mxu0
  %v821 = vadd.f32 %v176, %v820
  %822 = vmatmul.bf16.gmra.mxu0 %v474
  %v823 = vpop.f32.mrf.mxu0
  %v824 = vadd.f32 %v176, %v823
  %v825 = vpop.f32.mrf.mxu0
  %v826 = vadd.f32 %v176, %v825
  %827 = vmatmul.bf16.gmra.mxu0 %v475
  %v828 = vpop.f32.mrf.mxu0
  %v829 = vadd.f32 %v176, %v828
  %v830 = vpop.f32.mrf.mxu0
  %v831 = vadd.f32 %v176, %v830
  %832 = vmatmul.bf16.gmra.mxu0 %v476
  %v833 = vpop.f32.mrf.mxu0
  %v834 = vadd.f32 %v176, %v833
  %v835 = vpop.f32.mrf.mxu0
  %v836 = vadd.f32 %v176, %v835
  %837 = vmatmul.bf16.gmra.mxu0 %v477
  %v838 = vpop.f32.mrf.mxu0
  %v839 = vadd.f32 %v176, %v838
  %v840 = vpop.f32.mrf.mxu0
  %v841 = vadd.f32 %v176, %v840
  %842 = vmatmul.bf16.gmra.mxu0 %v478
  %v843 = vpop.f32.mrf.mxu0
  %v844 = vadd.f32 %v176, %v843
  %v845 = vpop.f32.mrf.mxu0
  %v846 = vadd.f32 %v176, %v845
  %847 = vmatmul.bf16.gmra.mxu0 %v479
  %v848 = vpop.f32.mrf.mxu0
  %v849 = vadd.f32 %v176, %v848
  %v850 = vpop.f32.mrf.mxu0
  %v851 = vadd.f32 %v176, %v850
  %852 = vmatmul.bf16.gmra.mxu0 %v480
  %v853 = vpop.f32.mrf.mxu0
  %v854 = vadd.f32 %v176, %v853
  %v855 = vpop.f32.mrf.mxu0
  %v856 = vadd.f32 %v176, %v855
  %857 = vmatmul.bf16.gmra.mxu0 %v481
  %v858 = vpop.f32.mrf.mxu0
  %v859 = vadd.f32 %v176, %v858
  %v860 = vpop.f32.mrf.mxu0
  %v861 = vadd.f32 %v176, %v860
  %862 = vmatmul.bf16.gmra.mxu0 %v482
  %v863 = vpop.f32.mrf.mxu0
  %v864 = vadd.f32 %v176, %v863
  %v865 = vpop.f32.mrf.mxu0
  %v866 = vadd.f32 %v176, %v865
  %867 = vmatmul.bf16.gmra.mxu0 %v483
  %v868 = vpop.f32.mrf.mxu0
  %v869 = vadd.f32 %v176, %v868
  %v870 = vpop.f32.mrf.mxu0
  %v871 = vadd.f32 %v176, %v870
  %872 = vmatmul.bf16.gmra.mxu0 %v484
  %v873 = vpop.f32.mrf.mxu0
  %v874 = vadd.f32 %v176, %v873
  %v875 = vpop.f32.mrf.mxu0
  %v876 = vadd.f32 %v176, %v875
  %877 = vmatmul.bf16.gmra.mxu0 %v485
  %v878 = vpop.f32.mrf.mxu0
  %v879 = vadd.f32 %v176, %v878
  %v880 = vpop.f32.mrf.mxu0
  %v881 = vadd.f32 %v176, %v880
  %882 = vmatmul.bf16.gmra.mxu0 %v486
  %v883 = vpop.f32.mrf.mxu0
  %v884 = vadd.f32 %v176, %v883
  %v885 = vpop.f32.mrf.mxu0
  %v886 = vadd.f32 %v176, %v885
  %887 = vmatmul.bf16.gmra.mxu0 %v487
  %v888 = vpop.f32.mrf.mxu0
  %v889 = vadd.f32 %v176, %v888
  %v890 = vpop.f32.mrf.mxu0
  %v891 = vadd.f32 %v176, %v890
  %892 = vmatmul.bf16.gmra.mxu0 %v488
  %v893 = vpop.f32.mrf.mxu0
  %v894 = vadd.f32 %v176, %v893
  %v895 = vpop.f32.mrf.mxu0
  %v896 = vadd.f32 %v176, %v895
  %897 = vmatmul.bf16.gmra.mxu0 %v489
  %v898 = vpop.f32.mrf.mxu0
  %v899 = vadd.f32 %v176, %v898
  %v900 = vpop.f32.mrf.mxu0
  %v901 = vadd.f32 %v176, %v900
  %902 = vmatmul.bf16.gmra.mxu0 %v490
  %v903 = vpop.f32.mrf.mxu0
  %v904 = vadd.f32 %v176, %v903
  %v905 = vpop.f32.mrf.mxu0
  %v906 = vadd.f32 %v176, %v905
  %907 = vmatmul.bf16.gmra.mxu0 %v491
  %v908 = vpop.f32.mrf.mxu0
  %v909 = vadd.f32 %v176, %v908
  %v910 = vpop.f32.mrf.mxu0
  %v911 = vadd.f32 %v176, %v910
  %912 = vmatmul.bf16.gmra.mxu0 %v492
  %v913 = vpop.f32.mrf.mxu0
  %v914 = vadd.f32 %v176, %v913
  %v915 = vpop.f32.mrf.mxu0
  %v916 = vadd.f32 %v176, %v915
  %917 = vmatmul.bf16.gmra.mxu0 %v493
  %v918 = vpop.f32.mrf.mxu0
  %v919 = vadd.f32 %v176, %v918
  %v920 = vpop.f32.mrf.mxu0
  %v921 = vadd.f32 %v176, %v920
  %922 = vmatmul.bf16.gmra.mxu0 %v494
  %v923 = vpop.f32.mrf.mxu0
  %v924 = vadd.f32 %v176, %v923
  %v925 = vpop.f32.mrf.mxu0
  %v926 = vadd.f32 %v176, %v925
  %927 = vmatmul.bf16.gmra.mxu0 %v495
  %v928 = vpop.f32.mrf.mxu0
  %v929 = vadd.f32 %v176, %v928
  %v930 = vpop.f32.mrf.mxu0
  %v931 = vadd.f32 %v176, %v930
  %932 = vmatmul.bf16.gmra.mxu0 %v496
  %v933 = vpop.f32.mrf.mxu0
  %v934 = vadd.f32 %v176, %v933
  %v935 = vpop.f32.mrf.mxu0
  %v936 = vadd.f32 %v176, %v935
  %937 = vdwg.mxu0
  %v938 = vmax.f32 %v619, 0.0
  %v939 = vmax.f32 %v621, 0.0
  %v940 = vmax.f32 %v624, 0.0
  %v941 = vmax.f32 %v626, 0.0
  %v942 = vmax.f32 %v629, 0.0
  %v943 = vmax.f32 %v631, 0.0
  %v944 = vmax.f32 %v634, 0.0
  %v945 = vmax.f32 %v636, 0.0
  %v946 = vmax.f32 %v639, 0.0
  %v947 = vmax.f32 %v641, 0.0
  %v948 = vmax.f32 %v644, 0.0
  %v949 = vmax.f32 %v646, 0.0
  %v950 = vmax.f32 %v649, 0.0
  %v951 = vmax.f32 %v651, 0.0
  %v952 = vmax.f32 %v654, 0.0
  %v953 = vmax.f32 %v656, 0.0
  %v954 = vmax.f32 %v659, 0.0
  %v955 = vmax.f32 %v661, 0.0
  %v956 = vmax.f32 %v664, 0.0
  %v957 = vmax.f32 %v666, 0.0
  %v958 = vmax.f32 %v669, 0.0
  %v959 = vmax.f32 %v671, 0.0
  %v960 = vmax.f32 %v674, 0.0
  %v961 = vmax.f32 %v676, 0.0
  %v962 = vmax.f32 %v679, 0.0
  %v963 = vmax.f32 %v681, 0.0
  %v964 = vmax.f32 %v684, 0.0
  %v965 = vmax.f32 %v686, 0.0
  %v966 = vmax.f32 %v689, 0.0
  %v967 = vmax.f32 %v691, 0.0
  %v968 = vmax.f32 %v694, 0.0
  %v969 = vmax.f32 %v696, 0.0
  %v970 = vmax.f32 %v699, 0.0
  %v971 = vmax.f32 %v701, 0.0
  %v972 = vmax.f32 %v704, 0.0
  %v973 = vmax.f32 %v706, 0.0
  %v974 = vmax.f32 %v709, 0.0
  %v975 = vmax.f32 %v711, 0.0
  %v976 = vmax.f32 %v714, 0.0
  %v977 = vmax.f32 %v716, 0.0
  %v978 = vmax.f32 %v719, 0.0
  %v979 = vmax.f32 %v721, 0.0
  %v980 = vmax.f32 %v724, 0.0
  %v981 = vmax.f32 %v726, 0.0
  %v982 = vmax.f32 %v729, 0.0
  %v983 = vmax.f32 %v731, 0.0
  %v984 = vmax.f32 %v734, 0.0
  %v985 = vmax.f32 %v736, 0.0
  %v986 = vmax.f32 %v739, 0.0
  %v987 = vmax.f32 %v741, 0.0
  %v988 = vmax.f32 %v744, 0.0
  %v989 = vmax.f32 %v746, 0.0
  %v990 = vmax.f32 %v749, 0.0
  %v991 = vmax.f32 %v751, 0.0
  %v992 = vmax.f32 %v754, 0.0
  %v993 = vmax.f32 %v756, 0.0
  %v994 = vmax.f32 %v759, 0.0
  %v995 = vmax.f32 %v761, 0.0
  %v996 = vmax.f32 %v764, 0.0
  %v997 = vmax.f32 %v766, 0.0
  %v998 = vmax.f32 %v769, 0.0
  %v999 = vmax.f32 %v771, 0.0
  %v1000 = vmax.f32 %v774, 0.0
  %v1001 = vmax.f32 %v776, 0.0
  %v1002 = vmax.f32 %v779, 0.0
  %v1003 = vmax.f32 %v781, 0.0
  %v1004 = vmax.f32 %v784, 0.0
  %v1005 = vmax.f32 %v786, 0.0
  %v1006 = vmax.f32 %v789, 0.0
  %v1007 = vmax.f32 %v791, 0.0
  %v1008 = vmax.f32 %v794, 0.0
  %v1009 = vmax.f32 %v796, 0.0
  %v1010 = vmax.f32 %v799, 0.0
  %v1011 = vmax.f32 %v801, 0.0
  %v1012 = vmax.f32 %v804, 0.0
  %v1013 = vmax.f32 %v806, 0.0
  %v1014 = vmax.f32 %v809, 0.0
  %v1015 = vmax.f32 %v811, 0.0
  %v1016 = vmax.f32 %v814, 0.0
  %v1017 = vmax.f32 %v816, 0.0
  %v1018 = vmax.f32 %v819, 0.0
  %v1019 = vmax.f32 %v821, 0.0
  %v1020 = vmax.f32 %v824, 0.0
  %v1021 = vmax.f32 %v826, 0.0
  %v1022 = vmax.f32 %v829, 0.0
  %v1023 = vmax.f32 %v831, 0.0
  %v1024 = vmax.f32 %v834, 0.0
  %v1025 = vmax.f32 %v836, 0.0
  %v1026 = vmax.f32 %v839, 0.0
  %v1027 = vmax.f32 %v841, 0.0
  %v1028 = vmax.f32 %v844, 0.0
  %v1029 = vmax.f32 %v846, 0.0
  %v1030 = vmax.f32 %v849, 0.0
  %v1031 = vmax.f32 %v851, 0.0
  %v1032 = vmax.f32 %v854, 0.0
  %v1033 = vmax.f32 %v856, 0.0
  %v1034 = vmax.f32 %v859, 0.0
  %v1035 = vmax.f32 %v861, 0.0
  %v1036 = vmax.f32 %v864, 0.0
  %v1037 = vmax.f32 %v866, 0.0
  %v1038 = vmax.f32 %v869, 0.0
  %v1039 = vmax.f32 %v871, 0.0
  %v1040 = vmax.f32 %v874, 0.0
  %v1041 = vmax.f32 %v876, 0.0
  %v1042 = vmax.f32 %v879, 0.0
  %v1043 = vmax.f32 %v881, 0.0
  %v1044 = vmax.f32 %v884, 0.0
  %v1045 = vmax.f32 %v886, 0.0
  %v1046 = vmax.f32 %v889, 0.0
  %v1047 = vmax.f32 %v891, 0.0
  %v1048 = vmax.f32 %v894, 0.0
  %v1049 = vmax.f32 %v896, 0.0
  %v1050 = vmax.f32 %v899, 0.0
  %v1051 = vmax.f32 %v901, 0.0
  %v1052 = vmax.f32 %v904, 0.0
  %v1053 = vmax.f32 %v906, 0.0
  %v1054 = vmax.f32 %v909, 0.0
  %v1055 = vmax.f32 %v911, 0.0
  %v1056 = vmax.f32 %v914, 0.0
  %v1057 = vmax.f32 %v916, 0.0
  %v1058 = vmax.f32 %v919, 0.0
  %v1059 = vmax.f32 %v921, 0.0
  %v1060 = vmax.f32 %v924, 0.0
  %v1061 = vmax.f32 %v926, 0.0
  %v1062 = vmax.f32 %v929, 0.0
  %v1063 = vmax.f32 %v931, 0.0
  %v1064 = vmax.f32 %v934, 0.0
  %v1065 = vmax.f32 %v936, 0.0
  %1066 = vst [vmem:[#allocation2] sm:$0xff] 0.0
  %v1067 = vadd.f32 %v938, %v939
  %v1068 = vadd.f32 %v1067, %v940
  %v1069 = vadd.f32 %v1068, %v941
  %v1070 = vadd.f32 %v1069, %v942
  %v1071 = vadd.f32 %v1070, %v943
  %v1072 = vadd.f32 %v1071, %v944
  %v1073 = vadd.f32 %v1072, %v945
  %v1074 = vadd.f32 %v1073, %v946
  %v1075 = vadd.f32 %v1074, %v947
  %v1076 = vadd.f32 %v1075, %v948
  %v1077 = vadd.f32 %v1076, %v949
  %v1078 = vadd.f32 %v1077, %v950
  %v1079 = vadd.f32 %v1078, %v951
  %v1080 = vadd.f32 %v1079, %v952
  %v1081 = vadd.f32 %v1080, %v953
  %v1082 = vadd.f32 %v1081, %v954
  %v1083 = vadd.f32 %v1082, %v955
  %v1084 = vadd.f32 %v1083, %v956
  %v1085 = vadd.f32 %v1084, %v957
  %v1086 = vadd.f32 %v1085, %v958
  %v1087 = vadd.f32 %v1086, %v959
  %v1088 = vadd.f32 %v1087, %v960
  %v1089 = vadd.f32 %v1088, %v961
  %v1090 = vadd.f32 %v1089, %v962
  %v1091 = vadd.f32 %v1090, %v963
  %v1092 = vadd.f32 %v1091, %v964
  %v1093 = vadd.f32 %v1092, %v965
  %v1094 = vadd.f32 %v1093, %v966
  %v1095 = vadd.f32 %v1094, %v967
  %v1096 = vadd.f32 %v1095, %v968
  %v1097 = vadd.f32 %v1096, %v969
  %v1098 = vrot.slane %v1097, 4
  %v1099 = vadd.f32 %v1097, %v1098
  %v1100 = vrot.slane %v1099, 2
  %v1101 = vadd.f32 %v1099, %v1100
  %v1102 = vrot.slane %v1101, 1
  %v1103 = vadd.f32 %v1101, %v1102
  %v1104 = vmul.f32 %v1103, 0.00390625
  %1105 = vst [vmem:[#allocation2] sm:$0x1] %v1104
  %v1106 = vadd.f32 %v970, %v971
  %v1107 = vadd.f32 %v1106, %v972
  %v1108 = vadd.f32 %v1107, %v973
  %v1109 = vadd.f32 %v1108, %v974
  %v1110 = vadd.f32 %v1109, %v975
  %v1111 = vadd.f32 %v1110, %v976
  %v1112 = vadd.f32 %v1111, %v977
  %v1113 = vadd.f32 %v1112, %v978
  %v1114 = vadd.f32 %v1113, %v979
  %v1115 = vadd.f32 %v1114, %v980
  %v1116 = vadd.f32 %v1115, %v981
  %v1117 = vadd.f32 %v1116, %v982
  %v1118 = vadd.f32 %v1117, %v983
  %v1119 = vadd.f32 %v1118, %v984
  %v1120 = vadd.f32 %v1119, %v985
  %v1121 = vadd.f32 %v1120, %v986
  %v1122 = vadd.f32 %v1121, %v987
  %v1123 = vadd.f32 %v1122, %v988
  %v1124 = vadd.f32 %v1123, %v989
  %v1125 = vadd.f32 %v1124, %v990
  %v1126 = vadd.f32 %v1125, %v991
  %v1127 = vadd.f32 %v1126, %v992
  %v1128 = vadd.f32 %v1127, %v993
  %v1129 = vadd.f32 %v1128, %v994
  %v1130 = vadd.f32 %v1129, %v995
  %v1131 = vadd.f32 %v1130, %v996
  %v1132 = vadd.f32 %v1131, %v997
  %v1133 = vadd.f32 %v1132, %v998
  %v1134 = vadd.f32 %v1133, %v999
  %v1135 = vadd.f32 %v1134, %v1000
  %v1136 = vadd.f32 %v1135, %v1001
  %v1137 = vrot.slane %v1136, 4
  %v1138 = vadd.f32 %v1136, %v1137
  %v1139 = vrot.slane %v1138, 2
  %v1140 = vadd.f32 %v1138, %v1139
  %v1141 = vrot.slane %v1140, 1
  %v1142 = vadd.f32 %v1140, %v1141
  %v1143 = vmul.f32 %v1142, 0.00390625
  %1144 = vst [vmem:[#allocation2 + $0x1] sm:$0x1] %v1143
  %v1145 = vadd.f32 %v1002, %v1003
  %v1146 = vadd.f32 %v1145, %v1004
  %v1147 = vadd.f32 %v1146, %v1005
  %v1148 = vadd.f32 %v1147, %v1006
  %v1149 = vadd.f32 %v1148, %v1007
  %v1150 = vadd.f32 %v1149, %v1008
  %v1151 = vadd.f32 %v1150, %v1009
  %v1152 = vadd.f32 %v1151, %v1010
  %v1153 = vadd.f32 %v1152, %v1011
  %v1154 = vadd.f32 %v1153, %v1012
  %v1155 = vadd.f32 %v1154, %v1013
  %v1156 = vadd.f32 %v1155, %v1014
  %v1157 = vadd.f32 %v1156, %v1015
  %v1158 = vadd.f32 %v1157, %v1016
  %v1159 = vadd.f32 %v1158, %v1017
  %v1160 = vadd.f32 %v1159, %v1018
  %v1161 = vadd.f32 %v1160, %v1019
  %v1162 = vadd.f32 %v1161, %v1020
  %v1163 = vadd.f32 %v1162, %v1021
  %v1164 = vadd.f32 %v1163, %v1022
  %v1165 = vadd.f32 %v1164, %v1023
  %v1166 = vadd.f32 %v1165, %v1024
  %v1167 = vadd.f32 %v1166, %v1025
  %v1168 = vadd.f32 %v1167, %v1026
  %v1169 = vadd.f32 %v1168, %v1027
  %v1170 = vadd.f32 %v1169, %v1028
  %v1171 = vadd.f32 %v1170, %v1029
  %v1172 = vadd.f32 %v1171, %v1030
  %v1173 = vadd.f32 %v1172, %v1031
  %v1174 = vadd.f32 %v1173, %v1032
  %v1175 = vadd.f32 %v1174, %v1033
  %v1176 = vrot.slane %v1175, 4
  %v1177 = vadd.f32 %v1175, %v1176
  %v1178 = vrot.slane %v1177, 2
  %v1179 = vadd.f32 %v1177, %v1178
  %v1180 = vrot.slane %v1179, 1
  %v1181 = vadd.f32 %v1179, %v1180
  %v1182 = vmul.f32 %v1181, 0.00390625
  %1183 = vst [vmem:[#allocation2 + $0x2] sm:$0x1] %v1182
  %v1184 = vadd.f32 %v1034, %v1035
  %v1185 = vadd.f32 %v1184, %v1036
  %v1186 = vadd.f32 %v1185, %v1037
  %v1187 = vadd.f32 %v1186, %v1038
  %v1188 = vadd.f32 %v1187, %v1039
  %v1189 = vadd.f32 %v1188, %v1040
  %v1190 = vadd.f32 %v1189, %v1041
  %v1191 = vadd.f32 %v1190, %v1042
  %v1192 = vadd.f32 %v1191, %v1043
  %v1193 = vadd.f32 %v1192, %v1044
  %v1194 = vadd.f32 %v1193, %v1045
  %v1195 = vadd.f32 %v1194, %v1046
  %v1196 = vadd.f32 %v1195, %v1047
  %v1197 = vadd.f32 %v1196, %v1048
  %v1198 = vadd.f32 %v1197, %v1049
  %v1199 = vadd.f32 %v1198, %v1050
  %v1200 = vadd.f32 %v1199, %v1051
  %v1201 = vadd.f32 %v1200, %v1052
  %v1202 = vadd.f32 %v1201, %v1053
  %v1203 = vadd.f32 %v1202, %v1054
  %v1204 = vadd.f32 %v1203, %v1055
  %v1205 = vadd.f32 %v1204, %v1056
  %v1206 = vadd.f32 %v1205, %v1057
  %v1207 = vadd.f32 %v1206, %v1058
  %v1208 = vadd.f32 %v1207, %v1059
  %v1209 = vadd.f32 %v1208, %v1060
  %v1210 = vadd.f32 %v1209, %v1061
  %v1211 = vadd.f32 %v1210, %v1062
  %v1212 = vadd.f32 %v1211, %v1063
  %v1213 = vadd.f32 %v1212, %v1064
  %v1214 = vadd.f32 %v1213, %v1065
  %v1215 = vrot.slane %v1214, 4
  %v1216 = vadd.f32 %v1214, %v1215
  %v1217 = vrot.slane %v1216, 2
  %v1218 = vadd.f32 %v1216, %v1217
  %v1219 = vrot.slane %v1218, 1
  %v1220 = vadd.f32 %v1218, %v1219
  %v1221 = vmul.f32 %v1220, 0.00390625
  %1222 = vst [vmem:[#allocation2 + $0x3] sm:$0x1] %v1221
  %v1223 = vld [vmem:[#allocation2] sm:$0xff]
  %v1224 = vpack.c.bf16 %v1223, %v1223
  %v1225 = vperm.slane %v175, 0
  %v1242 = vunpack.c.l.b16 %v158
  %v1243 = vunpack.c.l.b16 %v159
  %v1244 = vunpack.c.l.b16 %v160
  %v1245 = vunpack.c.l.b16 %v161
  %v1246 = vunpack.c.l.b16 %v162
  %v1247 = vunpack.c.l.b16 %v163
  %v1248 = vunpack.c.l.b16 %v164
  %v1249 = vunpack.c.l.b16 %v165
  %v1250 = vunpack.c.l.b16 %v166
  %v1251 = vunpack.c.l.b16 %v167
  %v1252 = vunpack.c.l.b16 %v168
  %v1253 = vunpack.c.l.b16 %v169
  %v1254 = vunpack.c.l.b16 %v170
  %v1255 = vunpack.c.l.b16 %v171
  %v1256 = vunpack.c.l.b16 %v172
  %v1257 = vunpack.c.l.b16 %v173
  %v1258 = vpack.c.b16 %v1243, %v1242
  %v1259 = vpack.c.b16 %v1245, %v1244
  %v1260 = vpack.c.b16 %v1247, %v1246
  %v1261 = vpack.c.b16 %v1249, %v1248
  %v1262 = vpack.c.b16 %v1251, %v1250
  %v1263 = vpack.c.b16 %v1253, %v1252
  %v1264 = vpack.c.b16 %v1255, %v1254
  %v1265 = vpack.c.b16 %v1257, %v1256
  %1274 = vmatpush.bf16.msra.mxu0 %v1265
  %1275 = vmatpush.bf16.msra.mxu0 %v1264
  %1276 = vmatpush.bf16.msra.mxu0 %v1263
  %1277 = vmatpush.bf16.msra.mxu0 %v1262
  %1278 = vmatpush.bf16.msra.mxu0 %v1261
  %1279 = vmatpush.bf16.msra.mxu0 %v1260
  %1280 = vmatpush.bf16.msra.mxu0 %v1259
  %1281 = vmatpush.bf16.msra.mxu0 %v1258
  %1282 = vmatmul.bf16.gmra.mxu0 %v1224
  %v1283 = vpop.f32.mrf.mxu0
  %v1284 = vadd.f32 %v1225, %v1283
  %v1285 = vpop.f32.mrf.mxu0
  %1286 = vdwg.mxu0
  %v1287 = vlaneseq
  %v1288 = vshrl.u32 %v1287, 7
  %vm1289 = vcmp.lt.s32.totalorder %v1288, 4
  %v1290 = vsel %vm1289, %v1284, 0.0
  %1291 = vst [vmem:[%s3] sm:$0xff] %v1290
  // Predicated region
  $region14: #{siamese_forward.1} parent=0 // pred_check
    _
  $region15: #{siamese_forward.1} parent=0 // pred_check_branch
    %1293 = sbr.rel (0) target = $region17
  $region16: #{siamese_forward.1} parent=0 // pred_region
    _
  $region17: #{siamese_forward.1} parent=0 // pred_fallthru
    _
  // Predicated region
  $region18: #{siamese_forward.1} parent=0 // pred_check
    _
  $region19: #{siamese_forward.1} parent=0 // pred_check_branch
    %1295 = sbr.rel (0) target = $region21
  $region20: #{siamese_forward.1} parent=0 // pred_region
    _
  $region21: #{siamese_forward.1} parent=0 // pred_fallthru
    _

</llo_original>
